<compile_context>
chip_gen: v7x
topology: tpu7x:2x2x1
jax: 0.10.0
libtpu: 0.0.40
codegen_flags: <defaults>
</compile_context>

<pallas_src>
import jax
import jax.numpy as jnp
from jax.experimental import pallas as pl
from jax.experimental.pallas import tpu as pltpu

# Model hyper-parameters (small, consistent with the module's forward).
INPUT_DIM = 16
NUM_LAYERS = 2
HIDDEN_DIM = 32
# `sigmoid(cross_out + deep_out)` requires output_dim == num_layers * input_dim.
OUTPUT_DIM = NUM_LAYERS * INPUT_DIM
BATCH = 8

_LANE = 128
_MAX_BLOCK_B = 8192            # ~10 MiB VMEM footprint at f32 intermediates


def _round_up(x, m):
    return (x + m - 1) // m * m


def dcn_forward(x, cross_w, cross_b, w1, b1, w2, b2, *, block_b=None):
    """DCN forward.

    x       : (B, D) f32
    cross_w : (L, D, D)  stored (in, out), y = x @ W + b (== torch Linear W.T)
    cross_b : (L, 1, D)
    w1, b1  : (D, H), (1, H)
    w2, b2  : (H, O), (1, O)
    returns : (B, O) = sigmoid(cross_out + deep_out)
    """
    B, D = x.shape
    L = cross_w.shape[0]
    H = w1.shape[1]
    O = w2.shape[1]
    assert L >= 2, "kernel packing assumes num_layers >= 2"
    assert O == L * D, (
        "sigmoid(cross_out + deep_out) requires output_dim == num_layers * input_dim")

    # ---- pack all parameters into one weight blob + one bias blob ------------
    Ncols = max(D + H, D + O)

    def padc(a):  # zero-pad on the output/column axis to a common width
        return jnp.pad(a.astype(jnp.float32), ((0, 0), (0, Ncols - a.shape[1])))

    # dot 1: fused [cross_w0 | w1]  (shared RHS x)
    w_rows = [padc(jnp.concatenate([cross_w[0], w1], axis=1))]                 # (D, D+H)
    b_rows = [padc(jnp.concatenate([cross_b[0].reshape(1, D),
                                    b1.reshape(1, H)], axis=1))]
    # intermediate cross layers 1..L-2 (none for L == 2)
    for i in range(1, L - 1):
        w_rows.append(padc(cross_w[i]))
        b_rows.append(padc(cross_b[i].reshape(1, D)))
    # dot 2: block-diagonal fusion of the last cross layer and deep layer 2
    blockdiag = jnp.zeros((D + H, D + O), jnp.float32)
    blockdiag = blockdiag.at[0:D, 0:D].set(cross_w[L - 1].astype(jnp.float32))
    blockdiag = blockdiag.at[D:D + H, D:D + O].set(w2.astype(jnp.float32))
    w_rows.append(padc(blockdiag))
    b_rows.append(padc(jnp.concatenate([cross_b[L - 1].reshape(1, D),
                                        b2.reshape(1, O)], axis=1)))

    wblob = jnp.concatenate(w_rows, axis=0).astype(jnp.bfloat16)   # (n_rows, Ncols)
    bblob = jnp.concatenate(b_rows, axis=0).astype(jnp.float32)    # (L, Ncols)
    n_rows = wblob.shape[0]
    off_bd = D + (L - 2) * D                                       # block-diag row offset

    # ---- batch tiling ---------------------------------------------------------
    if block_b is None:
        b_min = _round_up(B, _LANE)
        if b_min >= 2 * _LANE:
            # at least two grid steps so the "parallel" axis can shard across
            # v7x's two TensorCores (harmless on v5e/v6e).
            block_b = min(_MAX_BLOCK_B, _round_up((b_min + 1) // 2, _LANE))
        else:
            block_b = b_min
    assert block_b % 8 == 0, "batch tile must be a multiple of 8 sublanes"
    B_pad = _round_up(B, block_b)

    x_bf = x.astype(jnp.bfloat16)          # bf16 MXU operand, halves x DMA bytes
    if B_pad != B:
        x_bf = jnp.pad(x_bf, ((0, B_pad - B), (0, 0)))
    n_blocks = B_pad // block_b

    def kernel(x_ref, w_ref, b_ref, out_ref):
        xb = x_ref[...]                                   # (TB, D) bf16
        x0 = xb.astype(jnp.float32)                       # f32 copy for cross terms

        # ---- dot 1: fused [cross W0 | deep W1] @ x (single MXU round trip) ----
        y = jnp.dot(xb, w_ref[0:D, 0:D + H],
                    preferred_element_type=jnp.float32) + b_ref[0:1, 0:D + H]
        c0 = y[:, 0:D]                                    # cross layer-0 output
        h = jnp.maximum(y[:, D:D + H], 0.0)               # deep hidden (ReLU)

        x_list = [x0, c0]
        cross_cols = [c0]

        # ---- intermediate cross layers (mirrors the PyTorch loop exactly) -----
        for i in range(1, L - 1):
            x_ = x_list[-1]
            for x_pre in x_list[:-1]:
                x_ = x_ + jnp.sum(x_ * x_pre, axis=-1, keepdims=True)
            r0 = D + (i - 1) * D
            ci = jnp.dot(x_.astype(jnp.bfloat16), w_ref[r0:r0 + D, 0:D],
                         preferred_element_type=jnp.float32) + b_ref[i:i + 1, 0:D]
            x_list.append(ci)
            cross_cols.append(ci)

        # ---- dot 2: last cross layer + deep layer 2, block-diagonal fusion ----
        x_ = x_list[-1]
        for x_pre in x_list[:-1]:
            x_ = x_ + jnp.sum(x_ * x_pre, axis=-1, keepdims=True)
        rhs = jnp.concatenate([x_, h], axis=-1).astype(jnp.bfloat16)   # (TB, D+H)
        r = jnp.dot(rhs, w_ref[off_bd:off_bd + D + H, 0:D + O],
                    preferred_element_type=jnp.float32) + b_ref[L - 1:L, 0:D + O]
        cross_cols.append(r[:, 0:D])                      # last cross output
        deep = r[:, D:D + O]                              # deep network output

        # ---- output: sigmoid(concat(cross) + deep), slotted lane stores -------
        for i in range(L):
            z = cross_cols[i] + deep[:, i * D:(i + 1) * D]
            out_ref[:, i * D:(i + 1) * D] = pl.reciprocal(
                1.0 + jnp.exp(-z), approx=True)

    flops = 2 * B_pad * (D * (D + H) + (L - 2) * D * D + (D + H) * (D + O))
    cost = pl.CostEstimate(
        flops=flops,
        transcendentals=2 * B_pad * O,
        bytes_accessed=(2 * x_bf.size + 4 * O * B_pad
                        + 2 * wblob.size + 4 * bblob.size))

    out = pl.pallas_call(
        kernel,
        out_shape=jax.ShapeDtypeStruct((B_pad, O), jnp.float32),
        grid_spec=pltpu.PrefetchScalarGridSpec(
            num_scalar_prefetch=0,
            grid=(n_blocks,),
            in_specs=[
                pl.BlockSpec((block_b, D), lambda i: (i, 0)),     # batch-tiled x
                pl.BlockSpec((n_rows, Ncols), lambda i: (0, 0)),  # weights, resident
                pl.BlockSpec((L, Ncols), lambda i: (0, 0)),       # biases,  resident
            ],
            out_specs=pl.BlockSpec((block_b, O), lambda i: (i, 0)),
        ),
        compiler_params=pltpu.CompilerParams(
            dimension_semantics=("parallel",),
            vmem_limit_bytes=32 * 1024 * 1024),
        cost_estimate=cost,
    )(x_bf, wblob, bblob)

    return out if B_pad == B else out[:B]


def dcn_reference(x, cross_w, cross_b, w1, b1, w2, b2):
    """Pure-JAX reference mirroring the PyTorch module."""
    x = x.astype(jnp.float32)
    x_list = [x]
    for i in range(cross_w.shape[0]):
        x_ = x_list[-1]
        for x_pre in x_list[:-1]:
            x_ = x_ + jnp.sum(x_ * x_pre, axis=-1, keepdims=True)
        x_list.append(x_ @ cross_w[i] + cross_b[i])
    cross_out = jnp.concatenate(x_list[1:], axis=-1)
    deep_out = jnp.maximum(x @ w1 + b1, 0.0) @ w2 + b2
    return jax.nn.sigmoid(cross_out + deep_out)


def init_params(key):
    """Deterministic init (PyTorch-Linear-style uniform(-1/sqrt(fan_in), ...))."""
    ks = jax.random.split(key, 8)
    s_in = 1.0 / jnp.sqrt(INPUT_DIM)
    s_h = 1.0 / jnp.sqrt(HIDDEN_DIM)
    cross_w = jax.random.uniform(
        ks[0], (NUM_LAYERS, INPUT_DIM, INPUT_DIM), jnp.float32, -s_in, s_in)
    cross_b = jax.random.uniform(
        ks[1], (NUM_LAYERS, 1, INPUT_DIM), jnp.float32, -s_in, s_in)
    w1 = jax.random.uniform(ks[2], (INPUT_DIM, HIDDEN_DIM), jnp.float32, -s_in, s_in)
    b1 = jax.random.uniform(ks[3], (1, HIDDEN_DIM), jnp.float32, -s_in, s_in)
    w2 = jax.random.uniform(ks[4], (HIDDEN_DIM, OUTPUT_DIM), jnp.float32, -s_h, s_h)
    b2 = jax.random.uniform(ks[5], (1, OUTPUT_DIM), jnp.float32, -s_h, s_h)
    return cross_w, cross_b, w1, b1, w2, b2


if __name__ == "__main__":
    key = jax.random.PRNGKey(0)
    k_x, k_x2, k_x3, k_p = jax.random.split(key, 4)
    params = init_params(k_p)

    # bf16 MXU operands -> loosened tolerance (accumulation stays f32).
    TOL = 2e-2

    # Small batch (exercises padding to one 128-row tile).
    x = jax.random.normal(k_x, (BATCH, INPUT_DIM), jnp.float32)
    out = jax.block_until_ready(dcn_forward(x, *params))
    ref = dcn_reference(x, *params)
    assert out.shape == (BATCH, OUTPUT_DIM)
    assert jnp.allclose(out, ref, atol=TOL, rtol=0.0), "Pallas output != reference"

    # Non-multiple-of-128 batch with explicit 128-row blocks: exercises the
    # multi-step batch grid, resident-weight index maps and tail padding.
    x2 = jax.random.normal(k_x2, (300, INPUT_DIM), jnp.float32)
    out2 = jax.block_until_ready(dcn_forward(x2, *params, block_b=128))
    ref2 = dcn_reference(x2, *params)
    assert out2.shape == (300, OUTPUT_DIM)
    assert jnp.allclose(out2, ref2, atol=TOL, rtol=0.0), "Pallas output != reference (tiled)"

    # Default block selection path (>= 2 grid steps for megacore sharding).
    x3 = jax.random.normal(k_x3, (600, INPUT_DIM), jnp.float32)
    out3 = jax.block_until_ready(dcn_forward(x3, *params))
    ref3 = dcn_reference(x3, *params)
    assert out3.shape == (600, OUTPUT_DIM)
    assert jnp.allclose(out3, ref3, atol=TOL, rtol=0.0), "Pallas output != reference (default tiling)"

    print("KERNEL_OK")
</pallas_src>

<mosaic_0001>
module attributes {stable_mosaic.version = 11 : i64} {
  func.func @kernel(%arg0: i32, %arg1: memref<128x16xbf16, #tpu.memory_space<vmem>>, %arg2: memref<64x48xbf16, #tpu.memory_space<vmem>>, %arg3: memref<2x48xf32, #tpu.memory_space<vmem>>, %arg4: memref<128x32xf32, #tpu.memory_space<vmem>>) attributes {dimension_semantics = [#tpu.dimension_semantics<parallel>], iteration_bounds = array<i64: 1>, scalar_prefetch = 0 : i64, scratch_operands = 0 : i64, tpu.core_type = #tpu.core_type<tc>, window_params = [{transform_indices = @transform_0, window_bounds = array<i64: 128, 16>}, {pipeline_mode = #tpu.pipeline_mode<synchronous>, transform_indices = @transform_1, window_bounds = array<i64: 64, 48>}, {pipeline_mode = #tpu.pipeline_mode<synchronous>, transform_indices = @transform_2, window_bounds = array<i64: 2, 48>}, {transform_indices = @transform_3, window_bounds = array<i64: 128, 32>}]} {
    %c0 = arith.constant 0 : index
    %c0_0 = arith.constant 0 : index
    %0 = vector.load %arg1[%c0, %c0_0] : memref<128x16xbf16, #tpu.memory_space<vmem>>, vector<128x16xbf16>
    %1 = arith.extf %0 : vector<128x16xbf16> to vector<128x16xf32>
    %c0_1 = arith.constant 0 : index
    %c0_2 = arith.constant 0 : index
    %2 = vector.load %arg2[%c0_1, %c0_2] : memref<64x48xbf16, #tpu.memory_space<vmem>>, vector<16x48xbf16>
    %cst = arith.constant dense<0.000000e+00> : vector<128x48xf32>
    %3 = tpu.matmul %0, %2, %cst {dimension_numbers = #tpu.dot_dimension_numbers<[1], [0], [0], [1], [0, 0, 1, 1], [], []>} : vector<128x16xbf16>, vector<16x48xbf16>, vector<128x48xf32> -> vector<128x48xf32>
    %c0_3 = arith.constant 0 : index
    %c0_4 = arith.constant 0 : index
    %4 = vector.load %arg3[%c0_3, %c0_4] : memref<2x48xf32, #tpu.memory_space<vmem>>, vector<1x48xf32>
    %5 = vector.broadcast %4 : vector<1x48xf32> to vector<128x48xf32>
    %6 = arith.addf %3, %5 : vector<128x48xf32>
    %7 = vector.extract_strided_slice %6 {offsets = [0, 0], sizes = [128, 16], strides = [1, 1]} : vector<128x48xf32> to vector<128x16xf32>
    %8 = vector.extract_strided_slice %6 {offsets = [0, 16], sizes = [128, 32], strides = [1, 1]} : vector<128x48xf32> to vector<128x32xf32>
    %cst_5 = arith.constant 0.000000e+00 : f32
    %9 = vector.broadcast %cst_5 : f32 to vector<128x32xf32>
    %10 = arith.maximumf %8, %9 : vector<128x32xf32>
    %11 = arith.mulf %7, %1 : vector<128x16xf32>
    %cst_6 = arith.constant dense<0.000000e+00> : vector<128xf32>
    %12 = vector.multi_reduction <add>, %11, %cst_6 [1] : vector<128x16xf32> to vector<128xf32>
    %13 = vector.shape_cast %12 : vector<128xf32> to vector<128x1xf32>
    %14 = vector.broadcast %13 : vector<128x1xf32> to vector<128x16xf32>
    %15 = arith.addf %7, %14 : vector<128x16xf32>
    %16 = tpu.concatenate %15, %10 in 1 : vector<128x16xf32>, vector<128x32xf32> -> vector<128x48xf32>
    %17 = arith.truncf %16 : vector<128x48xf32> to vector<128x48xbf16>
    %c16 = arith.constant 16 : index
    %c0_7 = arith.constant 0 : index
    %18 = vector.load %arg2[%c16, %c0_7] : memref<64x48xbf16, #tpu.memory_space<vmem>>, vector<48x48xbf16>
    %cst_8 = arith.constant dense<0.000000e+00> : vector<128x48xf32>
    %19 = tpu.matmul %17, %18, %cst_8 {dimension_numbers = #tpu.dot_dimension_numbers<[1], [0], [0], [1], [0, 0, 1, 1], [], []>} : vector<128x48xbf16>, vector<48x48xbf16>, vector<128x48xf32> -> vector<128x48xf32>
    %c1 = arith.constant 1 : index
    %c0_9 = arith.constant 0 : index
    %20 = vector.load %arg3[%c1, %c0_9] : memref<2x48xf32, #tpu.memory_space<vmem>>, vector<1x48xf32>
    %21 = vector.broadcast %20 : vector<1x48xf32> to vector<128x48xf32>
    %22 = arith.addf %19, %21 : vector<128x48xf32>
    %23 = vector.extract_strided_slice %22 {offsets = [0, 0], sizes = [128, 16], strides = [1, 1]} : vector<128x48xf32> to vector<128x16xf32>
    %24 = vector.extract_strided_slice %22 {offsets = [0, 16], sizes = [128, 32], strides = [1, 1]} : vector<128x48xf32> to vector<128x32xf32>
    %25 = vector.extract_strided_slice %24 {offsets = [0, 0], sizes = [128, 16], strides = [1, 1]} : vector<128x32xf32> to vector<128x16xf32>
    %26 = arith.addf %7, %25 : vector<128x16xf32>
    %cst_10 = arith.constant 0.000000e+00 : f32
    %27 = vector.broadcast %cst_10 : f32 to vector<128x16xf32>
    %28 = arith.subf %27, %26 : vector<128x16xf32>
    %29 = math.exp %28 : vector<128x16xf32>
    %cst_11 = arith.constant 1.000000e+00 : f32
    %30 = vector.broadcast %cst_11 : f32 to vector<128x16xf32>
    %31 = arith.addf %30, %29 : vector<128x16xf32>
    %32 = tpu.reciprocal %31 {approx = true} : vector<128x16xf32> -> vector<128x16xf32>
    %c0_12 = arith.constant 0 : index
    %c0_13 = arith.constant 0 : index
    %33 = vector.load %arg4[%c0_12, %c0_13] : memref<128x32xf32, #tpu.memory_space<vmem>>, vector<128x16xf32>
    tpu.vector_store %arg4[%c0_12, %c0_13], %32 {strides = array<i32>} : memref<128x32xf32, #tpu.memory_space<vmem>>, vector<128x16xf32>,
    %34 = vector.extract_strided_slice %24 {offsets = [0, 16], sizes = [128, 16], strides = [1, 1]} : vector<128x32xf32> to vector<128x16xf32>
    %35 = arith.addf %23, %34 : vector<128x16xf32>
    %cst_14 = arith.constant 0.000000e+00 : f32
    %36 = vector.broadcast %cst_14 : f32 to vector<128x16xf32>
    %37 = arith.subf %36, %35 : vector<128x16xf32>
    %38 = math.exp %37 : vector<128x16xf32>
    %cst_15 = arith.constant 1.000000e+00 : f32
    %39 = vector.broadcast %cst_15 : f32 to vector<128x16xf32>
    %40 = arith.addf %39, %38 : vector<128x16xf32>
    %41 = tpu.reciprocal %40 {approx = true} : vector<128x16xf32> -> vector<128x16xf32>
    %c0_16 = arith.constant 0 : index
    %c16_17 = arith.constant 16 : index
    %42 = vector.load %arg4[%c0_16, %c16_17] : memref<128x32xf32, #tpu.memory_space<vmem>>, vector<128x16xf32>
    tpu.vector_store %arg4[%c0_16, %c16_17], %41 {strides = array<i32>} : memref<128x32xf32, #tpu.memory_space<vmem>>, vector<128x16xf32>,
    return
  }
  func.func @transform_0(%arg0: i32) -> (i32, i32) {
    %c0_i32 = arith.constant 0 : i32
    %c0_i32_0 = arith.constant 0 : i32
    return %arg0, %c0_i32 : i32, i32
  }
  func.func @transform_1(%arg0: i32) -> (i32, i32) {
    %c0_i32 = arith.constant 0 : i32
    %c0_i32_0 = arith.constant 0 : i32
    %c0_i32_1 = arith.constant 0 : i32
    return %c0_i32, %c0_i32_0 : i32, i32
  }
  func.func @transform_2(%arg0: i32) -> (i32, i32) {
    %c0_i32 = arith.constant 0 : i32
    %c0_i32_0 = arith.constant 0 : i32
    %c0_i32_1 = arith.constant 0 : i32
    return %c0_i32, %c0_i32_0 : i32, i32
  }
  func.func @transform_3(%arg0: i32) -> (i32, i32) {
    %c0_i32 = arith.constant 0 : i32
    %c0_i32_0 = arith.constant 0 : i32
    return %arg0, %c0_i32 : i32, i32
  }
}

</mosaic_0001>

<llo_original>
// kernel: tpu_custom_call.1
$region0: #{tpu_custom_call.1}
  #allocation0 [shape = 'u32[]', space=smem, size = 0x4, offset = 0x4, fixed_abs, tag = 'smem constant byte address 0x4 - core index']
  #allocation1 [shape = 'u32[144,128]{1,0:T(1,128)}', space=vmem, size = 0x12000, scoped, tag = 'internal scratch']
  %s0 = inlined_call_operand.vmem [shape: bf16[128,16], index: 0, kind: input, shape index: {}]
  %s1 = inlined_call_operand.vmem [shape: bf16[64,48], index: 1, kind: input, shape index: {}]
  %s2 = inlined_call_operand.vmem [shape: f32[2,48], index: 2, kind: input, shape index: {}]
  %s3 = inlined_call_operand.vmem [shape: f32[128,32], index: 3, kind: output, shape index: {}]
  %s4 = sld [smem:[#allocation0]]
  $region22: #{tpu_custom_call.1} parent=0
    _
  %s6 = ssub.s32 1, %s4
  %s7 = scalar_select 0, %s6, %s4
  // Predicated region
  $region2: #{tpu_custom_call.1} parent=0 // pred_check
    _
  $region3: #{tpu_custom_call.1} parent=0 // pred_check_branch
    %9 = sbr.rel (0) target = $region5
  $region4: #{tpu_custom_call.1} parent=0 // pred_region
    _
  $region5: #{tpu_custom_call.1} parent=0 // pred_fallthru
    _
  // Predicated region
  $region6: #{tpu_custom_call.1} parent=0 // pred_check
    _
  $region7: #{tpu_custom_call.1} parent=0 // pred_check_branch
    %11 = sbr.rel (0) target = $region9
  $region8: #{tpu_custom_call.1} parent=0 // pred_region
    _
  $region9: #{tpu_custom_call.1} parent=0 // pred_fallthru
    _
  // Predicated region
  $region10: #{tpu_custom_call.1} parent=0 // pred_check
    _
  $region11: #{tpu_custom_call.1} parent=0 // pred_check_branch
    %13 = sbr.rel (0) target = $region13
  $region12: #{tpu_custom_call.1} parent=0 // pred_region
    _
  $region13: #{tpu_custom_call.1} parent=0 // pred_fallthru
    _
  %v15 = vld [vmem:[%s0] sm:$0xf]
  %v16 = vld [vmem:[%s0 + $0x4] sm:$0xf]
  %v17 = vld [vmem:[%s0 + $0x8] sm:$0xf]
  %v18 = vld [vmem:[%s0 + $0xc] sm:$0xf]
  %v19 = vld [vmem:[%s0 + $0x10] sm:$0xf]
  %v20 = vld [vmem:[%s0 + $0x14] sm:$0xf]
  %v21 = vld [vmem:[%s0 + $0x18] sm:$0xf]
  %v22 = vld [vmem:[%s0 + $0x1c] sm:$0xf]
  %v23 = vld [vmem:[%s0 + $0x20] sm:$0xf]
  %v24 = vld [vmem:[%s0 + $0x24] sm:$0xf]
  %v25 = vld [vmem:[%s0 + $0x28] sm:$0xf]
  %v26 = vld [vmem:[%s0 + $0x2c] sm:$0xf]
  %v27 = vld [vmem:[%s0 + $0x30] sm:$0xf]
  %v28 = vld [vmem:[%s0 + $0x34] sm:$0xf]
  %v29 = vld [vmem:[%s0 + $0x38] sm:$0xf]
  %v30 = vld [vmem:[%s0 + $0x3c] sm:$0xf]
  %v31 = vunpack.c.l.bf16 %v15
  %v32 = vunpack.c.l.bf16 %v16
  %v33 = vunpack.c.l.bf16 %v17
  %v34 = vunpack.c.l.bf16 %v18
  %v35 = vunpack.c.l.bf16 %v19
  %v36 = vunpack.c.l.bf16 %v20
  %v37 = vunpack.c.l.bf16 %v21
  %v38 = vunpack.c.l.bf16 %v22
  %v39 = vunpack.c.l.bf16 %v23
  %v40 = vunpack.c.l.bf16 %v24
  %v41 = vunpack.c.l.bf16 %v25
  %v42 = vunpack.c.l.bf16 %v26
  %v43 = vunpack.c.l.bf16 %v27
  %v44 = vunpack.c.l.bf16 %v28
  %v45 = vunpack.c.l.bf16 %v29
  %v46 = vunpack.c.l.bf16 %v30
  %v47 = vld [vmem:[%s1] sm:$0xf]
  %v48 = vld [vmem:[%s1 + $0x4] sm:$0xf]
  %v49 = vld [vmem:[%s2] sm:$0x1]
  %v50 = vlaneseq
  %v51 = vshrl.u32 %v50, 7
  %v52 = vsub.s32 0, %v51
  %v53 = vrot.slane %v49, %v52
  %v70 = vunpack.c.l.b16 %v15
  %v71 = vunpack.c.l.b16 %v16
  %v72 = vunpack.c.l.b16 %v17
  %v73 = vunpack.c.l.b16 %v18
  %v74 = vunpack.c.l.b16 %v19
  %v75 = vunpack.c.l.b16 %v20
  %v76 = vunpack.c.l.b16 %v21
  %v77 = vunpack.c.l.b16 %v22
  %v78 = vunpack.c.l.b16 %v23
  %v79 = vunpack.c.l.b16 %v24
  %v80 = vunpack.c.l.b16 %v25
  %v81 = vunpack.c.l.b16 %v26
  %v82 = vunpack.c.l.b16 %v27
  %v83 = vunpack.c.l.b16 %v28
  %v84 = vunpack.c.l.b16 %v29
  %v85 = vunpack.c.l.b16 %v30
  %v86 = vpack.c.b16 %v71, %v70
  %v87 = vpack.c.b16 %v73, %v72
  %v88 = vpack.c.b16 %v75, %v74
  %v89 = vpack.c.b16 %v77, %v76
  %v90 = vpack.c.b16 %v79, %v78
  %v91 = vpack.c.b16 %v81, %v80
  %v92 = vpack.c.b16 %v83, %v82
  %v93 = vpack.c.b16 %v85, %v84
  %v96 = vunpack.c.l.b16 %v47
  %v97 = vunpack.c.l.b16 %v48
  %v98 = vpack.c.b16 %v97, %v96
  %vm100 = vcmask 130048
  %v102 = vsel %vm100, %v86, 0
  %v105 = vsel %vm100, %v87, 0
  %v108 = vsel %vm100, %v88, 0
  %v111 = vsel %vm100, %v89, 0
  %v114 = vsel %vm100, %v90, 0
  %v117 = vsel %vm100, %v91, 0
  %v120 = vsel %vm100, %v92, 0
  %v123 = vsel %vm100, %v93, 0
  %125 = vmatprep.subr.bf16.mxu0 0
  %126 = vmatpush1.bf16.msra.mxu0 %v98
  %127 = vmatprep.subr.bf16.mxu0 0
  %128 = vmatpush1.bf16.msra.mxu0 0
  %129 = vmatprep.subr.bf16.mxu0 0
  %130 = vmatpush1.bf16.msra.mxu0 0
  %131 = vmatprep.subr.bf16.mxu0 0
  %132 = vmatpush1.bf16.msra.mxu0 0
  %133 = vmatprep.subr.bf16.mxu0 0
  %134 = vmatpush1.bf16.msra.mxu0 0
  %135 = vmatprep.subr.bf16.mxu0 0
  %136 = vmatpush1.bf16.msra.mxu0 0
  %137 = vmatprep.subr.bf16.mxu0 0
  %138 = vmatpush1.bf16.msra.mxu0 0
  %139 = vmatprep.subr.bf16.mxu0 0
  %140 = vmatpush1.bf16.msra.mxu0 0
  %141 = vmatprep.subr.bf16.mxu0 0
  %142 = vmatpush1.bf16.msra.mxu0 0
  %143 = vmatprep.subr.bf16.mxu0 0
  %144 = vmatpush1.bf16.msra.mxu0 0
  %145 = vmatprep.subr.bf16.mxu0 0
  %146 = vmatpush1.bf16.msra.mxu0 0
  %147 = vmatprep.subr.bf16.mxu0 0
  %148 = vmatpush1.bf16.msra.mxu0 0
  %149 = vmatprep.subr.bf16.mxu0 0
  %150 = vmatpush1.bf16.msra.mxu0 0
  %151 = vmatprep.subr.bf16.mxu0 0
  %152 = vmatpush1.bf16.msra.mxu0 0
  %153 = vmatprep.subr.bf16.mxu0 0
  %154 = vmatpush1.bf16.msra.mxu0 0
  %155 = vmatprep.subr.bf16.mxu0 0
  %156 = vmatpush1.bf16.msra.mxu0 0
  %157 = vmatprep.mubr.bf16.mxu0 0
  %158 = vmatmul.mubr.bf16.gmra.mrb[0].mxu0 %v102
  %v159 = vpop.f32.mrb[0].mxu0
  %v160 = vadd.f32 %v53, %v159
  %v161 = vpop.f32.mrb[0].mxu0
  %v162 = vpop.f32.mrb[0].mxu0
  %v163 = vadd.f32 %v53, %v162
  %v164 = vpop.f32.mrb[0].mxu0
  %165 = vmatprep.mubr.bf16.mxu0 0
  %166 = vmatmul.mubr.bf16.gmra.mrb[0].mxu0 %v105
  %v167 = vpop.f32.mrb[0].mxu0
  %v168 = vadd.f32 %v53, %v167
  %v169 = vpop.f32.mrb[0].mxu0
  %v170 = vpop.f32.mrb[0].mxu0
  %v171 = vadd.f32 %v53, %v170
  %v172 = vpop.f32.mrb[0].mxu0
  %173 = vmatprep.mubr.bf16.mxu0 0
  %174 = vmatmul.mubr.bf16.gmra.mrb[0].mxu0 %v108
  %v175 = vpop.f32.mrb[0].mxu0
  %v176 = vadd.f32 %v53, %v175
  %v177 = vpop.f32.mrb[0].mxu0
  %v178 = vpop.f32.mrb[0].mxu0
  %v179 = vadd.f32 %v53, %v178
  %v180 = vpop.f32.mrb[0].mxu0
  %181 = vmatprep.mubr.bf16.mxu0 0
  %182 = vmatmul.mubr.bf16.gmra.mrb[0].mxu0 %v111
  %v183 = vpop.f32.mrb[0].mxu0
  %v184 = vadd.f32 %v53, %v183
  %v185 = vpop.f32.mrb[0].mxu0
  %v186 = vpop.f32.mrb[0].mxu0
  %v187 = vadd.f32 %v53, %v186
  %v188 = vpop.f32.mrb[0].mxu0
  %189 = vmatprep.mubr.bf16.mxu0 0
  %190 = vmatmul.mubr.bf16.gmra.mrb[0].mxu0 %v114
  %v191 = vpop.f32.mrb[0].mxu0
  %v192 = vadd.f32 %v53, %v191
  %v193 = vpop.f32.mrb[0].mxu0
  %v194 = vpop.f32.mrb[0].mxu0
  %v195 = vadd.f32 %v53, %v194
  %v196 = vpop.f32.mrb[0].mxu0
  %197 = vmatprep.mubr.bf16.mxu0 0
  %198 = vmatmul.mubr.bf16.gmra.mrb[0].mxu0 %v117
  %v199 = vpop.f32.mrb[0].mxu0
  %v200 = vadd.f32 %v53, %v199
  %v201 = vpop.f32.mrb[0].mxu0
  %v202 = vpop.f32.mrb[0].mxu0
  %v203 = vadd.f32 %v53, %v202
  %v204 = vpop.f32.mrb[0].mxu0
  %205 = vmatprep.mubr.bf16.mxu0 0
  %206 = vmatmul.mubr.bf16.gmra.mrb[0].mxu0 %v120
  %v207 = vpop.f32.mrb[0].mxu0
  %v208 = vadd.f32 %v53, %v207
  %v209 = vpop.f32.mrb[0].mxu0
  %v210 = vpop.f32.mrb[0].mxu0
  %v211 = vadd.f32 %v53, %v210
  %v212 = vpop.f32.mrb[0].mxu0
  %213 = vmatprep.mubr.bf16.mxu0 0
  %214 = vmatmul.mubr.bf16.gmra.mrb[0].mxu0 %v123
  %v215 = vpop.f32.mrb[0].mxu0
  %v216 = vadd.f32 %v53, %v215
  %v217 = vpop.f32.mrb[0].mxu0
  %v218 = vpop.f32.mrb[0].mxu0
  %v219 = vadd.f32 %v53, %v218
  %v220 = vpop.f32.mrb[0].mxu0
  %221 = vdwg.mxu0
  %v222 = vmax.f32 %v160, 0.0
  %v223 = vmax.f32 %v163, 0.0
  %v224 = vmax.f32 %v168, 0.0
  %v225 = vmax.f32 %v171, 0.0
  %v226 = vmax.f32 %v176, 0.0
  %v227 = vmax.f32 %v179, 0.0
  %v228 = vmax.f32 %v184, 0.0
  %v229 = vmax.f32 %v187, 0.0
  %v230 = vmax.f32 %v192, 0.0
  %v231 = vmax.f32 %v195, 0.0
  %v232 = vmax.f32 %v200, 0.0
  %v233 = vmax.f32 %v203, 0.0
  %v234 = vmax.f32 %v208, 0.0
  %v235 = vmax.f32 %v211, 0.0
  %v236 = vmax.f32 %v216, 0.0
  %v237 = vmax.f32 %v219, 0.0
  %v238 = vmul.f32 %v160, %v31
  %v239 = vmul.f32 %v163, %v32
  %v240 = vmul.f32 %v168, %v33
  %v241 = vmul.f32 %v171, %v34
  %v242 = vmul.f32 %v176, %v35
  %v243 = vmul.f32 %v179, %v36
  %v244 = vmul.f32 %v184, %v37
  %v245 = vmul.f32 %v187, %v38
  %v246 = vmul.f32 %v192, %v39
  %v247 = vmul.f32 %v195, %v40
  %v248 = vmul.f32 %v200, %v41
  %v249 = vmul.f32 %v203, %v42
  %v250 = vmul.f32 %v208, %v43
  %v251 = vmul.f32 %v211, %v44
  %v252 = vmul.f32 %v216, %v45
  %v253 = vmul.f32 %v219, %v46
  %v254 = vsel %vm100, %v238, 0.0
  %255 = vadd.xlane.f32.xlu0 %v254
  %v256 = vpop.xlane.xlu0 %255
  %v257 = vsel %vm100, %v239, 0.0
  %258 = vadd.xlane.f32.xlu0 %v257
  %v259 = vpop.xlane.xlu0 %258
  %v260 = vsel %vm100, %v240, 0.0
  %261 = vadd.xlane.f32.xlu0 %v260
  %v262 = vpop.xlane.xlu0 %261
  %v263 = vsel %vm100, %v241, 0.0
  %264 = vadd.xlane.f32.xlu0 %v263
  %v265 = vpop.xlane.xlu0 %264
  %v266 = vsel %vm100, %v242, 0.0
  %267 = vadd.xlane.f32.xlu0 %v266
  %v268 = vpop.xlane.xlu0 %267
  %v269 = vsel %vm100, %v243, 0.0
  %270 = vadd.xlane.f32.xlu0 %v269
  %v271 = vpop.xlane.xlu0 %270
  %v272 = vsel %vm100, %v244, 0.0
  %273 = vadd.xlane.f32.xlu0 %v272
  %v274 = vpop.xlane.xlu0 %273
  %v275 = vsel %vm100, %v245, 0.0
  %276 = vadd.xlane.f32.xlu0 %v275
  %v277 = vpop.xlane.xlu0 %276
  %v278 = vsel %vm100, %v246, 0.0
  %279 = vadd.xlane.f32.xlu0 %v278
  %v280 = vpop.xlane.xlu0 %279
  %v281 = vsel %vm100, %v247, 0.0
  %282 = vadd.xlane.f32.xlu0 %v281
  %v283 = vpop.xlane.xlu0 %282
  %v284 = vsel %vm100, %v248, 0.0
  %285 = vadd.xlane.f32.xlu0 %v284
  %v286 = vpop.xlane.xlu0 %285
  %v287 = vsel %vm100, %v249, 0.0
  %288 = vadd.xlane.f32.xlu0 %v287
  %v289 = vpop.xlane.xlu0 %288
  %v290 = vsel %vm100, %v250, 0.0
  %291 = vadd.xlane.f32.xlu0 %v290
  %v292 = vpop.xlane.xlu0 %291
  %v293 = vsel %vm100, %v251, 0.0
  %294 = vadd.xlane.f32.xlu0 %v293
  %v295 = vpop.xlane.xlu0 %294
  %v296 = vsel %vm100, %v252, 0.0
  %297 = vadd.xlane.f32.xlu0 %v296
  %v298 = vpop.xlane.xlu0 %297
  %v299 = vsel %vm100, %v253, 0.0
  %300 = vadd.xlane.f32.xlu0 %v299
  %v301 = vpop.xlane.xlu0 %300
  %v302 = vadd.f32 %v160, %v256
  %v303 = vadd.f32 %v163, %v259
  %v304 = vadd.f32 %v168, %v262
  %v305 = vadd.f32 %v171, %v265
  %v306 = vadd.f32 %v176, %v268
  %v307 = vadd.f32 %v179, %v271
  %v308 = vadd.f32 %v184, %v274
  %v309 = vadd.f32 %v187, %v277
  %v310 = vadd.f32 %v192, %v280
  %v311 = vadd.f32 %v195, %v283
  %v312 = vadd.f32 %v200, %v286
  %v313 = vadd.f32 %v203, %v289
  %v314 = vadd.f32 %v208, %v292
  %v315 = vadd.f32 %v211, %v295
  %v316 = vadd.f32 %v216, %v298
  %v317 = vadd.f32 %v219, %v301
  %v318 = vsel %vm100, %v302, %v222
  %v319 = vsel %vm100, %v303, %v223
  %v320 = vsel %vm100, %v304, %v224
  %v321 = vsel %vm100, %v305, %v225
  %v322 = vsel %vm100, %v306, %v226
  %v323 = vsel %vm100, %v307, %v227
  %v324 = vsel %vm100, %v308, %v228
  %v325 = vsel %vm100, %v309, %v229
  %v326 = vsel %vm100, %v310, %v230
  %v327 = vsel %vm100, %v311, %v231
  %v328 = vsel %vm100, %v312, %v232
  %v329 = vsel %vm100, %v313, %v233
  %v330 = vsel %vm100, %v314, %v234
  %v331 = vsel %vm100, %v315, %v235
  %v332 = vsel %vm100, %v316, %v236
  %v333 = vsel %vm100, %v317, %v237
  %v334 = vpack.c.bf16 %v319, %v318
  %v335 = vpack.c.bf16 %v321, %v320
  %v336 = vpack.c.bf16 %v323, %v322
  %v337 = vpack.c.bf16 %v325, %v324
  %v338 = vpack.c.bf16 %v327, %v326
  %v339 = vpack.c.bf16 %v329, %v328
  %v340 = vpack.c.bf16 %v331, %v330
  %v341 = vpack.c.bf16 %v333, %v332
  %v342 = vld [vmem:[%s1 + $0x8] sm:$0xf]
  %v343 = vld [vmem:[%s1 + $0xc] sm:$0xf]
  %v344 = vld [vmem:[%s1 + $0x10] sm:$0xf]
  %v345 = vld [vmem:[%s1 + $0x14] sm:$0xf]
  %v346 = vld [vmem:[%s1 + $0x18] sm:$0xf]
  %v347 = vld [vmem:[%s1 + $0x1c] sm:$0xf]
  %v348 = vld [vmem:[%s2 + $0x1] sm:$0x1]
  %v349 = vlaneseq
  %v350 = vshrl.u32 %v349, 7
  %v351 = vsub.s32 0, %v350
  %v352 = vrot.slane %v348, %v351
  %v359 = vunpack.c.l.b16 %v342
  %v360 = vunpack.c.l.b16 %v343
  %v361 = vunpack.c.l.b16 %v344
  %v362 = vunpack.c.l.b16 %v345
  %v363 = vunpack.c.l.b16 %v346
  %v364 = vunpack.c.l.b16 %v347
  %v365 = vpack.c.b16 %v360, %v359
  %v366 = vpack.c.b16 %v362, %v361
  %v367 = vpack.c.b16 %v364, %v363
  %vm371 = vcmask 392192
  %v373 = vsel %vm371, %v334, 0
  %v376 = vsel %vm371, %v335, 0
  %v379 = vsel %vm371, %v336, 0
  %v382 = vsel %vm371, %v337, 0
  %v385 = vsel %vm371, %v338, 0
  %v388 = vsel %vm371, %v339, 0
  %v391 = vsel %vm371, %v340, 0
  %v394 = vsel %vm371, %v341, 0
  %396 = vmatprep.subr.bf16.mxu0 0
  %397 = vmatpush1.bf16.msra.mxu0 %v365
  %398 = vmatprep.subr.bf16.mxu0 0
  %399 = vmatpush1.bf16.msra.mxu0 %v366
  %400 = vmatprep.subr.bf16.mxu0 0
  %401 = vmatpush1.bf16.msra.mxu0 %v367
  %402 = vmatprep.subr.bf16.mxu0 0
  %403 = vmatpush1.bf16.msra.mxu0 0
  %404 = vmatprep.subr.bf16.mxu0 0
  %405 = vmatpush1.bf16.msra.mxu0 0
  %406 = vmatprep.subr.bf16.mxu0 0
  %407 = vmatpush1.bf16.msra.mxu0 0
  %408 = vmatprep.subr.bf16.mxu0 0
  %409 = vmatpush1.bf16.msra.mxu0 0
  %410 = vmatprep.subr.bf16.mxu0 0
  %411 = vmatpush1.bf16.msra.mxu0 0
  %412 = vmatprep.subr.bf16.mxu0 0
  %413 = vmatpush1.bf16.msra.mxu0 0
  %414 = vmatprep.subr.bf16.mxu0 0
  %415 = vmatpush1.bf16.msra.mxu0 0
  %416 = vmatprep.subr.bf16.mxu0 0
  %417 = vmatpush1.bf16.msra.mxu0 0
  %418 = vmatprep.subr.bf16.mxu0 0
  %419 = vmatpush1.bf16.msra.mxu0 0
  %420 = vmatprep.subr.bf16.mxu0 0
  %421 = vmatpush1.bf16.msra.mxu0 0
  %422 = vmatprep.subr.bf16.mxu0 0
  %423 = vmatpush1.bf16.msra.mxu0 0
  %424 = vmatprep.subr.bf16.mxu0 0
  %425 = vmatpush1.bf16.msra.mxu0 0
  %426 = vmatprep.subr.bf16.mxu0 0
  %427 = vmatpush1.bf16.msra.mxu0 0
  %428 = vmatprep.mubr.bf16.mxu0 0
  %429 = vmatmul.mubr.bf16.gmra.mrb[0].mxu0 %v373
  %v430 = vpop.f32.mrb[0].mxu0
  %v431 = vadd.f32 %v352, %v430
  %v432 = vpop.f32.mrb[0].mxu0
  %v433 = vpop.f32.mrb[0].mxu0
  %v434 = vadd.f32 %v352, %v433
  %v435 = vpop.f32.mrb[0].mxu0
  %436 = vmatprep.mubr.bf16.mxu0 0
  %437 = vmatmul.mubr.bf16.gmra.mrb[0].mxu0 %v376
  %v438 = vpop.f32.mrb[0].mxu0
  %v439 = vadd.f32 %v352, %v438
  %v440 = vpop.f32.mrb[0].mxu0
  %v441 = vpop.f32.mrb[0].mxu0
  %v442 = vadd.f32 %v352, %v441
  %v443 = vpop.f32.mrb[0].mxu0
  %444 = vmatprep.mubr.bf16.mxu0 0
  %445 = vmatmul.mubr.bf16.gmra.mrb[0].mxu0 %v379
  %v446 = vpop.f32.mrb[0].mxu0
  %v447 = vadd.f32 %v352, %v446
  %v448 = vpop.f32.mrb[0].mxu0
  %v449 = vpop.f32.mrb[0].mxu0
  %v450 = vadd.f32 %v352, %v449
  %v451 = vpop.f32.mrb[0].mxu0
  %452 = vmatprep.mubr.bf16.mxu0 0
  %453 = vmatmul.mubr.bf16.gmra.mrb[0].mxu0 %v382
  %v454 = vpop.f32.mrb[0].mxu0
  %v455 = vadd.f32 %v352, %v454
  %v456 = vpop.f32.mrb[0].mxu0
  %v457 = vpop.f32.mrb[0].mxu0
  %v458 = vadd.f32 %v352, %v457
  %v459 = vpop.f32.mrb[0].mxu0
  %460 = vmatprep.mubr.bf16.mxu0 0
  %461 = vmatmul.mubr.bf16.gmra.mrb[0].mxu0 %v385
  %v462 = vpop.f32.mrb[0].mxu0
  %v463 = vadd.f32 %v352, %v462
  %v464 = vpop.f32.mrb[0].mxu0
  %v465 = vpop.f32.mrb[0].mxu0
  %v466 = vadd.f32 %v352, %v465
  %v467 = vpop.f32.mrb[0].mxu0
  %468 = vmatprep.mubr.bf16.mxu0 0
  %469 = vmatmul.mubr.bf16.gmra.mrb[0].mxu0 %v388
  %v470 = vpop.f32.mrb[0].mxu0
  %v471 = vadd.f32 %v352, %v470
  %v472 = vpop.f32.mrb[0].mxu0
  %v473 = vpop.f32.mrb[0].mxu0
  %v474 = vadd.f32 %v352, %v473
  %v475 = vpop.f32.mrb[0].mxu0
  %476 = vmatprep.mubr.bf16.mxu0 0
  %477 = vmatmul.mubr.bf16.gmra.mrb[0].mxu0 %v391
  %v478 = vpop.f32.mrb[0].mxu0
  %v479 = vadd.f32 %v352, %v478
  %v480 = vpop.f32.mrb[0].mxu0
  %v481 = vpop.f32.mrb[0].mxu0
  %v482 = vadd.f32 %v352, %v481
  %v483 = vpop.f32.mrb[0].mxu0
  %484 = vmatprep.mubr.bf16.mxu0 0
  %485 = vmatmul.mubr.bf16.gmra.mrb[0].mxu0 %v394
  %v486 = vpop.f32.mrb[0].mxu0
  %v487 = vadd.f32 %v352, %v486
  %v488 = vpop.f32.mrb[0].mxu0
  %v489 = vpop.f32.mrb[0].mxu0
  %v490 = vadd.f32 %v352, %v489
  %v491 = vpop.f32.mrb[0].mxu0
  %492 = vdwg.mxu0
  %509 = vrot.lane.b32.xlu0 %v431, 112
  %v510 = vpop.permute.xlu0 %509
  %511 = vrot.lane.b32.xlu0 %v434, 112
  %v512 = vpop.permute.xlu0 %511
  %513 = vrot.lane.b32.xlu0 %v439, 112
  %v514 = vpop.permute.xlu0 %513
  %515 = vrot.lane.b32.xlu0 %v442, 112
  %v516 = vpop.permute.xlu0 %515
  %517 = vrot.lane.b32.xlu0 %v447, 112
  %v518 = vpop.permute.xlu0 %517
  %519 = vrot.lane.b32.xlu0 %v450, 112
  %v520 = vpop.permute.xlu0 %519
  %521 = vrot.lane.b32.xlu0 %v455, 112
  %v522 = vpop.permute.xlu0 %521
  %523 = vrot.lane.b32.xlu0 %v458, 112
  %v524 = vpop.permute.xlu0 %523
  %525 = vrot.lane.b32.xlu0 %v463, 112
  %v526 = vpop.permute.xlu0 %525
  %527 = vrot.lane.b32.xlu0 %v466, 112
  %v528 = vpop.permute.xlu0 %527
  %529 = vrot.lane.b32.xlu0 %v471, 112
  %v530 = vpop.permute.xlu0 %529
  %531 = vrot.lane.b32.xlu0 %v474, 112
  %v532 = vpop.permute.xlu0 %531
  %533 = vrot.lane.b32.xlu0 %v479, 112
  %v534 = vpop.permute.xlu0 %533
  %535 = vrot.lane.b32.xlu0 %v482, 112
  %v536 = vpop.permute.xlu0 %535
  %537 = vrot.lane.b32.xlu0 %v487, 112
  %v538 = vpop.permute.xlu0 %537
  %539 = vrot.lane.b32.xlu0 %v490, 112
  %v540 = vpop.permute.xlu0 %539
  %v557 = vadd.f32 %v160, %v510
  %v558 = vadd.f32 %v163, %v512
  %v559 = vadd.f32 %v168, %v514
  %v560 = vadd.f32 %v171, %v516
  %v561 = vadd.f32 %v176, %v518
  %v562 = vadd.f32 %v179, %v520
  %v563 = vadd.f32 %v184, %v522
  %v564 = vadd.f32 %v187, %v524
  %v565 = vadd.f32 %v192, %v526
  %v566 = vadd.f32 %v195, %v528
  %v567 = vadd.f32 %v200, %v530
  %v568 = vadd.f32 %v203, %v532
  %v569 = vadd.f32 %v208, %v534
  %v570 = vadd.f32 %v211, %v536
  %v571 = vadd.f32 %v216, %v538
  %v572 = vadd.f32 %v219, %v540
  %v573 = vsub.f32 0.0, %v557
  %v574 = vsub.f32 0.0, %v558
  %v575 = vsub.f32 0.0, %v559
  %v576 = vsub.f32 0.0, %v560
  %v577 = vsub.f32 0.0, %v561
  %v578 = vsub.f32 0.0, %v562
  %v579 = vsub.f32 0.0, %v563
  %v580 = vsub.f32 0.0, %v564
  %v581 = vsub.f32 0.0, %v565
  %v582 = vsub.f32 0.0, %v566
  %v583 = vsub.f32 0.0, %v567
  %v584 = vsub.f32 0.0, %v568
  %v585 = vsub.f32 0.0, %v569
  %v586 = vsub.f32 0.0, %v570
  %v587 = vsub.f32 0.0, %v571
  %v588 = vsub.f32 0.0, %v572
  %v589 = vmul.f32 %v573, 1.442695
  %v590 = vpow.pop %v589
  %v591 = vmul.f32 %v574, 1.442695
  %v592 = vpow.pop %v591
  %v593 = vmul.f32 %v575, 1.442695
  %v594 = vpow.pop %v593
  %v595 = vmul.f32 %v576, 1.442695
  %v596 = vpow.pop %v595
  %v597 = vmul.f32 %v577, 1.442695
  %v598 = vpow.pop %v597
  %v599 = vmul.f32 %v578, 1.442695
  %v600 = vpow.pop %v599
  %v601 = vmul.f32 %v579, 1.442695
  %v602 = vpow.pop %v601
  %v603 = vmul.f32 %v580, 1.442695
  %v604 = vpow.pop %v603
  %v605 = vmul.f32 %v581, 1.442695
  %v606 = vpow.pop %v605
  %v607 = vmul.f32 %v582, 1.442695
  %v608 = vpow.pop %v607
  %v609 = vmul.f32 %v583, 1.442695
  %v610 = vpow.pop %v609
  %v611 = vmul.f32 %v584, 1.442695
  %v612 = vpow.pop %v611
  %v613 = vmul.f32 %v585, 1.442695
  %v614 = vpow.pop %v613
  %v615 = vmul.f32 %v586, 1.442695
  %v616 = vpow.pop %v615
  %v617 = vmul.f32 %v587, 1.442695
  %v618 = vpow.pop %v617
  %v619 = vmul.f32 %v588, 1.442695
  %v620 = vpow.pop %v619
  %v621 = vadd.f32 %v590, 1.0
  %v622 = vadd.f32 %v592, 1.0
  %v623 = vadd.f32 %v594, 1.0
  %v624 = vadd.f32 %v596, 1.0
  %v625 = vadd.f32 %v598, 1.0
  %v626 = vadd.f32 %v600, 1.0
  %v627 = vadd.f32 %v602, 1.0
  %v628 = vadd.f32 %v604, 1.0
  %v629 = vadd.f32 %v606, 1.0
  %v630 = vadd.f32 %v608, 1.0
  %v631 = vadd.f32 %v610, 1.0
  %v632 = vadd.f32 %v612, 1.0
  %v633 = vadd.f32 %v614, 1.0
  %v634 = vadd.f32 %v616, 1.0
  %v635 = vadd.f32 %v618, 1.0
  %v636 = vadd.f32 %v620, 1.0
  %v637 = vrcp.pop %v621
  %v638 = vrcp.pop %v622
  %v639 = vrcp.pop %v623
  %v640 = vrcp.pop %v624
  %v641 = vrcp.pop %v625
  %v642 = vrcp.pop %v626
  %v643 = vrcp.pop %v627
  %v644 = vrcp.pop %v628
  %v645 = vrcp.pop %v629
  %v646 = vrcp.pop %v630
  %v647 = vrcp.pop %v631
  %v648 = vrcp.pop %v632
  %v649 = vrcp.pop %v633
  %v650 = vrcp.pop %v634
  %v651 = vrcp.pop %v635
  %v652 = vrcp.pop %v636
  %653 = vst.msk [vmem:[%s3] sm:$0xff] %vm100, %v637
  %654 = vst.msk [vmem:[%s3 + $0x8] sm:$0xff] %vm100, %v638
  %655 = vst.msk [vmem:[%s3 + $0x10] sm:$0xff] %vm100, %v639
  %656 = vst.msk [vmem:[%s3 + $0x18] sm:$0xff] %vm100, %v640
  %657 = vst.msk [vmem:[%s3 + $0x20] sm:$0xff] %vm100, %v641
  %658 = vst.msk [vmem:[%s3 + $0x28] sm:$0xff] %vm100, %v642
  %659 = vst.msk [vmem:[%s3 + $0x30] sm:$0xff] %vm100, %v643
  %660 = vst.msk [vmem:[%s3 + $0x38] sm:$0xff] %vm100, %v644
  %661 = vst.msk [vmem:[%s3 + $0x40] sm:$0xff] %vm100, %v645
  %662 = vst.msk [vmem:[%s3 + $0x48] sm:$0xff] %vm100, %v646
  %663 = vst.msk [vmem:[%s3 + $0x50] sm:$0xff] %vm100, %v647
  %664 = vst.msk [vmem:[%s3 + $0x58] sm:$0xff] %vm100, %v648
  %665 = vst.msk [vmem:[%s3 + $0x60] sm:$0xff] %vm100, %v649
  %666 = vst.msk [vmem:[%s3 + $0x68] sm:$0xff] %vm100, %v650
  %667 = vst.msk [vmem:[%s3 + $0x70] sm:$0xff] %vm100, %v651
  %668 = vst.msk [vmem:[%s3 + $0x78] sm:$0xff] %vm100, %v652
  %669 = vrot.lane.b32.xlu0 %v431, 96
  %v670 = vpop.permute.xlu0 %669
  %671 = vrot.lane.b32.xlu0 %v434, 96
  %v672 = vpop.permute.xlu0 %671
  %673 = vrot.lane.b32.xlu0 %v439, 96
  %v674 = vpop.permute.xlu0 %673
  %675 = vrot.lane.b32.xlu0 %v442, 96
  %v676 = vpop.permute.xlu0 %675
  %677 = vrot.lane.b32.xlu0 %v447, 96
  %v678 = vpop.permute.xlu0 %677
  %679 = vrot.lane.b32.xlu0 %v450, 96
  %v680 = vpop.permute.xlu0 %679
  %681 = vrot.lane.b32.xlu0 %v455, 96
  %v682 = vpop.permute.xlu0 %681
  %683 = vrot.lane.b32.xlu0 %v458, 96
  %v684 = vpop.permute.xlu0 %683
  %685 = vrot.lane.b32.xlu0 %v463, 96
  %v686 = vpop.permute.xlu0 %685
  %687 = vrot.lane.b32.xlu0 %v466, 96
  %v688 = vpop.permute.xlu0 %687
  %689 = vrot.lane.b32.xlu0 %v471, 96
  %v690 = vpop.permute.xlu0 %689
  %691 = vrot.lane.b32.xlu0 %v474, 96
  %v692 = vpop.permute.xlu0 %691
  %693 = vrot.lane.b32.xlu0 %v479, 96
  %v694 = vpop.permute.xlu0 %693
  %695 = vrot.lane.b32.xlu0 %v482, 96
  %v696 = vpop.permute.xlu0 %695
  %697 = vrot.lane.b32.xlu0 %v487, 96
  %v698 = vpop.permute.xlu0 %697
  %699 = vrot.lane.b32.xlu0 %v490, 96
  %v700 = vpop.permute.xlu0 %699
  %v717 = vadd.f32 %v431, %v670
  %v718 = vadd.f32 %v434, %v672
  %v719 = vadd.f32 %v439, %v674
  %v720 = vadd.f32 %v442, %v676
  %v721 = vadd.f32 %v447, %v678
  %v722 = vadd.f32 %v450, %v680
  %v723 = vadd.f32 %v455, %v682
  %v724 = vadd.f32 %v458, %v684
  %v725 = vadd.f32 %v463, %v686
  %v726 = vadd.f32 %v466, %v688
  %v727 = vadd.f32 %v471, %v690
  %v728 = vadd.f32 %v474, %v692
  %v729 = vadd.f32 %v479, %v694
  %v730 = vadd.f32 %v482, %v696
  %v731 = vadd.f32 %v487, %v698
  %v732 = vadd.f32 %v490, %v700
  %v733 = vsub.f32 0.0, %v717
  %v734 = vsub.f32 0.0, %v718
  %v735 = vsub.f32 0.0, %v719
  %v736 = vsub.f32 0.0, %v720
  %v737 = vsub.f32 0.0, %v721
  %v738 = vsub.f32 0.0, %v722
  %v739 = vsub.f32 0.0, %v723
  %v740 = vsub.f32 0.0, %v724
  %v741 = vsub.f32 0.0, %v725
  %v742 = vsub.f32 0.0, %v726
  %v743 = vsub.f32 0.0, %v727
  %v744 = vsub.f32 0.0, %v728
  %v745 = vsub.f32 0.0, %v729
  %v746 = vsub.f32 0.0, %v730
  %v747 = vsub.f32 0.0, %v731
  %v748 = vsub.f32 0.0, %v732
  %v749 = vmul.f32 %v733, 1.442695
  %v750 = vpow.pop %v749
  %v751 = vmul.f32 %v734, 1.442695
  %v752 = vpow.pop %v751
  %v753 = vmul.f32 %v735, 1.442695
  %v754 = vpow.pop %v753
  %v755 = vmul.f32 %v736, 1.442695
  %v756 = vpow.pop %v755
  %v757 = vmul.f32 %v737, 1.442695
  %v758 = vpow.pop %v757
  %v759 = vmul.f32 %v738, 1.442695
  %v760 = vpow.pop %v759
  %v761 = vmul.f32 %v739, 1.442695
  %v762 = vpow.pop %v761
  %v763 = vmul.f32 %v740, 1.442695
  %v764 = vpow.pop %v763
  %v765 = vmul.f32 %v741, 1.442695
  %v766 = vpow.pop %v765
  %v767 = vmul.f32 %v742, 1.442695
  %v768 = vpow.pop %v767
  %v769 = vmul.f32 %v743, 1.442695
  %v770 = vpow.pop %v769
  %v771 = vmul.f32 %v744, 1.442695
  %v772 = vpow.pop %v771
  %v773 = vmul.f32 %v745, 1.442695
  %v774 = vpow.pop %v773
  %v775 = vmul.f32 %v746, 1.442695
  %v776 = vpow.pop %v775
  %v777 = vmul.f32 %v747, 1.442695
  %v778 = vpow.pop %v777
  %v779 = vmul.f32 %v748, 1.442695
  %v780 = vpow.pop %v779
  %v781 = vadd.f32 %v750, 1.0
  %v782 = vadd.f32 %v752, 1.0
  %v783 = vadd.f32 %v754, 1.0
  %v784 = vadd.f32 %v756, 1.0
  %v785 = vadd.f32 %v758, 1.0
  %v786 = vadd.f32 %v760, 1.0
  %v787 = vadd.f32 %v762, 1.0
  %v788 = vadd.f32 %v764, 1.0
  %v789 = vadd.f32 %v766, 1.0
  %v790 = vadd.f32 %v768, 1.0
  %v791 = vadd.f32 %v770, 1.0
  %v792 = vadd.f32 %v772, 1.0
  %v793 = vadd.f32 %v774, 1.0
  %v794 = vadd.f32 %v776, 1.0
  %v795 = vadd.f32 %v778, 1.0
  %v796 = vadd.f32 %v780, 1.0
  %v797 = vrcp.pop %v781
  %v798 = vrcp.pop %v782
  %v799 = vrcp.pop %v783
  %v800 = vrcp.pop %v784
  %v801 = vrcp.pop %v785
  %v802 = vrcp.pop %v786
  %v803 = vrcp.pop %v787
  %v804 = vrcp.pop %v788
  %v805 = vrcp.pop %v789
  %v806 = vrcp.pop %v790
  %v807 = vrcp.pop %v791
  %v808 = vrcp.pop %v792
  %v809 = vrcp.pop %v793
  %v810 = vrcp.pop %v794
  %v811 = vrcp.pop %v795
  %v812 = vrcp.pop %v796
  %829 = vrot.lane.b32.xlu0 %v797, 16
  %v830 = vpop.permute.xlu0 %829
  %831 = vrot.lane.b32.xlu0 %v798, 16
  %v832 = vpop.permute.xlu0 %831
  %833 = vrot.lane.b32.xlu0 %v799, 16
  %v834 = vpop.permute.xlu0 %833
  %835 = vrot.lane.b32.xlu0 %v800, 16
  %v836 = vpop.permute.xlu0 %835
  %837 = vrot.lane.b32.xlu0 %v801, 16
  %v838 = vpop.permute.xlu0 %837
  %839 = vrot.lane.b32.xlu0 %v802, 16
  %v840 = vpop.permute.xlu0 %839
  %841 = vrot.lane.b32.xlu0 %v803, 16
  %v842 = vpop.permute.xlu0 %841
  %843 = vrot.lane.b32.xlu0 %v804, 16
  %v844 = vpop.permute.xlu0 %843
  %845 = vrot.lane.b32.xlu0 %v805, 16
  %v846 = vpop.permute.xlu0 %845
  %847 = vrot.lane.b32.xlu0 %v806, 16
  %v848 = vpop.permute.xlu0 %847
  %849 = vrot.lane.b32.xlu0 %v807, 16
  %v850 = vpop.permute.xlu0 %849
  %851 = vrot.lane.b32.xlu0 %v808, 16
  %v852 = vpop.permute.xlu0 %851
  %853 = vrot.lane.b32.xlu0 %v809, 16
  %v854 = vpop.permute.xlu0 %853
  %855 = vrot.lane.b32.xlu0 %v810, 16
  %v856 = vpop.permute.xlu0 %855
  %857 = vrot.lane.b32.xlu0 %v811, 16
  %v858 = vpop.permute.xlu0 %857
  %859 = vrot.lane.b32.xlu0 %v812, 16
  %v860 = vpop.permute.xlu0 %859
  %vm877 = vcmask 261248
  %878 = vst.msk [vmem:[%s3] sm:$0xff] %vm877, %v830
  %879 = vst.msk [vmem:[%s3 + $0x8] sm:$0xff] %vm877, %v832
  %880 = vst.msk [vmem:[%s3 + $0x10] sm:$0xff] %vm877, %v834
  %881 = vst.msk [vmem:[%s3 + $0x18] sm:$0xff] %vm877, %v836
  %882 = vst.msk [vmem:[%s3 + $0x20] sm:$0xff] %vm877, %v838
  %883 = vst.msk [vmem:[%s3 + $0x28] sm:$0xff] %vm877, %v840
  %884 = vst.msk [vmem:[%s3 + $0x30] sm:$0xff] %vm877, %v842
  %885 = vst.msk [vmem:[%s3 + $0x38] sm:$0xff] %vm877, %v844
  %886 = vst.msk [vmem:[%s3 + $0x40] sm:$0xff] %vm877, %v846
  %887 = vst.msk [vmem:[%s3 + $0x48] sm:$0xff] %vm877, %v848
  %888 = vst.msk [vmem:[%s3 + $0x50] sm:$0xff] %vm877, %v850
  %889 = vst.msk [vmem:[%s3 + $0x58] sm:$0xff] %vm877, %v852
  %890 = vst.msk [vmem:[%s3 + $0x60] sm:$0xff] %vm877, %v854
  %891 = vst.msk [vmem:[%s3 + $0x68] sm:$0xff] %vm877, %v856
  %892 = vst.msk [vmem:[%s3 + $0x70] sm:$0xff] %vm877, %v858
  %893 = vst.msk [vmem:[%s3 + $0x78] sm:$0xff] %vm877, %v860
  // Predicated region
  $region14: #{tpu_custom_call.1} parent=0 // pred_check
    _
  $region15: #{tpu_custom_call.1} parent=0 // pred_check_branch
    %895 = sbr.rel (0) target = $region17
  $region16: #{tpu_custom_call.1} parent=0 // pred_region
    _
  $region17: #{tpu_custom_call.1} parent=0 // pred_fallthru
    _
  // Predicated region
  $region18: #{tpu_custom_call.1} parent=0 // pred_check
    _
  $region19: #{tpu_custom_call.1} parent=0 // pred_check_branch
    %897 = sbr.rel (0) target = $region21
  $region20: #{tpu_custom_call.1} parent=0 // pred_region
    _
  $region21: #{tpu_custom_call.1} parent=0 // pred_fallthru
    _

</llo_original>
